<compile_context>
chip_gen: v7x
topology: tpu7x:2x2x1
jax: 0.10.0
libtpu: 0.0.40
codegen_flags: <defaults>
</compile_context>

<pallas_src>
import math
from functools import partial

import jax
import jax.numpy as jnp
from jax.experimental import pallas as pl
from jax.experimental.pallas import tpu as pltpu

_TARGET_TILE_BYTES = 4 << 20   # ~4 MiB x tile: >=90% of HBM roofline on all gens
_VMEM_LIMIT_BYTES = 32 << 20   # covers double-buffered footprint everywhere


def _pe_add_kernel(x_ref, pe_ref, o_ref):
    # x_ref / o_ref: (TB, TL) tile of the flattened (B*C, S*D) input / output.
    # pe_ref:        (1, TL)  tile of the flattened pe row, broadcast over TB sublanes.
    o_ref[...] = x_ref[...] + pe_ref[...]


def make_positional_encoding(d_model: int, max_seq_len: int, dtype=jnp.float32):
    """Build the pe buffer, shape (1, max_seq_len, d_model). Handles odd d_model."""
    position = jnp.arange(0, max_seq_len, dtype=jnp.float32)[:, None]             # (L, 1)
    div_term = jnp.exp(
        jnp.arange(0, d_model, 2, dtype=jnp.float32) * (-math.log(10000.0) / d_model)
    )                                                                              # (ceil(D/2),)
    angles = position * div_term                                                   # (L, ceil(D/2))
    pe = jnp.zeros((max_seq_len, d_model), dtype=jnp.float32)
    pe = pe.at[:, 0::2].set(jnp.sin(angles))                                       # ceil(D/2) cols
    pe = pe.at[:, 1::2].set(jnp.cos(angles[:, : d_model // 2]))                    # floor(D/2) cols
    return pe[None, :, :].astype(dtype)                                            # (1, L, D)


def _round_up(a: int, b: int) -> int:
    return ((a + b - 1) // b) * b


def _pick_tiles(rows: int, cols: int, itemsize: int, target_bytes: int):
    """Pick (TB, TL) near target_bytes. No divisor constraint: cdiv grid + masked edges.

    TL is a multiple of 128 (or the full extent when cols < 128); TB is a multiple
    of the sublane packing (or the full extent when rows are fewer than that).
    """
    LANE = 128
    SUB = max(8, 32 // itemsize)        # 8 for f32, 16 for bf16, 32 for int8

    rows_cap = rows if rows <= SUB else _round_up(rows, SUB)
    cols_cap = cols if cols <= LANE else _round_up(cols, LANE)

    # Lane (last) dim: start in the 512..2048 range, never above the padded extent.
    if cols <= LANE:
        tl = cols                                   # full extent (always legal)
    else:
        tl = min(cols_cap, 16 * LANE)               # 2048 lanes

    # Row dim: sized so tb*tl*itemsize ~= target_bytes.
    if rows <= SUB:
        tb = rows                                   # full extent
    else:
        want = max(SUB, target_bytes // max(1, tl * itemsize))
        tb = max(SUB, min(rows_cap, (want // SUB) * SUB))

    # If rows ran out before hitting the byte target, spend the remainder on TL.
    if cols > LANE and tb * tl * itemsize < target_bytes:
        want = max(LANE, target_bytes // max(1, tb * itemsize))
        tl = min(cols_cap, max(tl, (want // LANE) * LANE))

    return tb, tl


# donate_argnums=(0,): lets the pallas-level alias {0: 0} reuse x's HBM buffer
# (no defensive copy).  Callers must not reference x after this call.
@partial(jax.jit, donate_argnums=(0,))
def positional_encoding_forward(x, pe):
    """x: (B, C, S, D); pe: (1, max_seq_len, D). Returns x + pe[:, :S]."""
    B, C, S, D = x.shape
    assert D == pe.shape[-1], "d_model mismatch"
    assert S <= pe.shape[1], "sequence longer than max_seq_len"

    dtype = x.dtype
    pe_slice = pe[0, :S, :].astype(dtype)           # (S, D)

    rows = B * C
    cols = S * D

    # Lane-dense flattening: last dim presented to Pallas is S*D.
    x_flat = x.reshape(rows, cols)
    pe_flat = pe_slice.reshape(1, cols)

    itemsize = jnp.dtype(dtype).itemsize
    tb, tl = _pick_tiles(rows, cols, itemsize, _TARGET_TILE_BYTES)

    # Column blocks OUTER, row blocks INNER: pe's block index (0, j) is constant
    # across consecutive (inner) steps, so Pallas skips its re-DMA -> pe is read
    # once per column block.  The leading (column) axis also carries the work for
    # v7x megacore sharding even when rows // tb == 1.
    grid = (pl.cdiv(cols, tl), pl.cdiv(rows, tb))

    out_flat = pl.pallas_call(
        _pe_add_kernel,
        out_shape=jax.ShapeDtypeStruct((rows, cols), dtype),
        grid_spec=pltpu.PrefetchScalarGridSpec(
            num_scalar_prefetch=0,
            grid=grid,
            in_specs=[
                pl.BlockSpec((tb, tl), lambda j, i: (i, j)),   # x tile
                pl.BlockSpec((1, tl), lambda j, i: (0, j)),    # pe row (constant over i)
            ],
            out_specs=pl.BlockSpec((tb, tl), lambda j, i: (i, j)),
        ),
        compiler_params=pltpu.CompilerParams(
            dimension_semantics=("parallel", "parallel"),
            vmem_limit_bytes=_VMEM_LIMIT_BYTES,
        ),
        cost_estimate=pl.CostEstimate(
            flops=rows * cols,
            bytes_accessed=2 * rows * cols * itemsize + cols * itemsize,
            transcendentals=0,
        ),
        # In-place add: avoids a second full-size HBM activation (needs donation above).
        input_output_aliases={0: 0},
    )(x_flat, pe_flat)

    return out_flat.reshape(B, C, S, D)


if __name__ == "__main__":
    # Small shapes consistent with the forward pass: x = (B, C, S, d_model)
    B, C, S = 2, 4, 16
    d_model, max_seq_len = 32, 32

    key = jax.random.PRNGKey(0)
    x = jax.random.normal(key, (B, C, S, d_model), dtype=jnp.float32)

    pe = make_positional_encoding(d_model, max_seq_len, dtype=x.dtype)

    # Reference check (pure JAX, same broadcast semantics as the torch module).
    # Computed BEFORE the kernel call because x is donated to the kernel.
    ref = x + pe[:, :S]

    out = positional_encoding_forward(x, pe)
    out = jax.block_until_ready(out)

    assert out.shape == ref.shape
    assert jnp.allclose(out, ref, atol=1e-6), "mismatch vs reference"

    print("KERNEL_OK")
</pallas_src>

<mosaic_0001>
module attributes {stable_mosaic.version = 11 : i64} {
  func.func @_pe_add_kernel(%arg0: i32, %arg1: i32, %arg2: memref<8x512xf32, #tpu.memory_space<vmem>>, %arg3: memref<1x512xf32, #tpu.memory_space<vmem>>, %arg4: memref<8x512xf32, #tpu.memory_space<vmem>>) attributes {dimension_semantics = [#tpu.dimension_semantics<parallel>, #tpu.dimension_semantics<parallel>], iteration_bounds = array<i64: 1, 1>, scalar_prefetch = 0 : i64, scratch_operands = 0 : i64, tpu.core_type = #tpu.core_type<tc>, window_params = [{transform_indices = @transform_0, window_bounds = array<i64: 8, 512>}, {transform_indices = @transform_1, window_bounds = array<i64: 1, 512>}, {transform_indices = @transform_2, window_bounds = array<i64: 8, 512>}]} {
    %c0 = arith.constant 0 : index
    %c0_0 = arith.constant 0 : index
    %0 = vector.load %arg2[%c0, %c0_0] : memref<8x512xf32, #tpu.memory_space<vmem>>, vector<8x512xf32>
    %c0_1 = arith.constant 0 : index
    %c0_2 = arith.constant 0 : index
    %1 = vector.load %arg3[%c0_1, %c0_2] : memref<1x512xf32, #tpu.memory_space<vmem>>, vector<1x512xf32>
    %2 = vector.broadcast %1 : vector<1x512xf32> to vector<8x512xf32>
    %3 = arith.addf %0, %2 : vector<8x512xf32>
    %c0_3 = arith.constant 0 : index
    %c0_4 = arith.constant 0 : index
    %4 = vector.load %arg4[%c0_3, %c0_4] : memref<8x512xf32, #tpu.memory_space<vmem>>, vector<8x512xf32>
    tpu.vector_store %arg4[%c0_3, %c0_4], %3 {strides = array<i32>} : memref<8x512xf32, #tpu.memory_space<vmem>>, vector<8x512xf32>,
    return
  }
  func.func @transform_0(%arg0: i32, %arg1: i32) -> (i32, i32) {
    %c0_i32 = arith.constant 0 : i32
    return %arg1, %arg0 : i32, i32
  }
  func.func @transform_1(%arg0: i32, %arg1: i32) -> (i32, i32) {
    %c0_i32 = arith.constant 0 : i32
    %c0_i32_0 = arith.constant 0 : i32
    return %c0_i32, %arg0 : i32, i32
  }
  func.func @transform_2(%arg0: i32, %arg1: i32) -> (i32, i32) {
    %c0_i32 = arith.constant 0 : i32
    return %arg1, %arg0 : i32, i32
  }
}

</mosaic_0001>

<llo_original>
// kernel: squeeze.1
$region0: #{squeeze.1}
  %s0 = inlined_call_operand.vmem [shape: f32[1,16,32], index: 0, kind: input, shape index: {}]
  %s1 = inlined_call_operand.vmem [shape: f32[1,512], index: 1, kind: output, shape index: {}]
  $region1: #{squeeze.1} parent=0
    #allocation0 [shape = 'u8[16384]{0}', space=vmem, size = 0x4000, scoped, tag = 'scoped mem for output reshape']
    %v2 = vld [vmem:[%s0] ss:$4 sm:$0xf]
    %vm3 = vcmask 261120
    %4 = vst.msk [vmem:[#allocation0] ss:$8 sm:$0xf] %vm3, %v2
    %s5 = scalar_lea.vmem %s0, 3
    %v6 = vld [vmem:[%s5] ss:$4 sm:$0xf]
    %7 = vrot.lane.b32.xlu0 %v6, 96
    %v8 = vpop.permute.xlu0 %7
    %vm9 = vcmask 1048320
    %10 = vst.msk [vmem:[#allocation0] ss:$8 sm:$0xf] %vm9, %v8
    %s11 = scalar_lea.vmem %s0, 2
    %v12 = vld [vmem:[%s11] ss:$4 sm:$0xf]
    %13 = vrot.lane.b32.xlu0 %v12, 64
    %v14 = vpop.permute.xlu0 %13
    %vm15 = vcmask 785920
    %16 = vst.msk [vmem:[#allocation0] ss:$8 sm:$0xf] %vm15, %v14
    %s17 = scalar_lea.vmem %s0, 1
    %v18 = vld [vmem:[%s17] ss:$4 sm:$0xf]
    %19 = vrot.lane.b32.xlu0 %v18, 32
    %v20 = vpop.permute.xlu0 %19
    %vm21 = vcmask 523520
    %22 = vst.msk [vmem:[#allocation0] ss:$8 sm:$0xf] %vm21, %v20
    %s24 = sshllo.u32 0, 1
    %v26 = vld [vmem:[#allocation0] sm:%s24]
    %s27 = sshllo.u32 0, 1
    %28 = vst [vmem:[%s1] sm:%s27] %v26
    %s29 = scalar_lea.vmem [#allocation0], 8
    %v30 = vld [vmem:[%s29] sm:%s24]
    %s31 = sshllo.u32 0, 1
    %s32 = scalar_lea.vmem %s1, 1
    %33 = vst [vmem:[%s32] sm:%s31] %v30
    %s34 = scalar_lea.vmem [#allocation0], 16
    %v35 = vld [vmem:[%s34] sm:%s24]
    %s36 = sshllo.u32 0, 1
    %s37 = smul.addr 1, 2
    %s38 = scalar_lea.vmem %s1, %s37
    %39 = vst [vmem:[%s38] sm:%s36] %v35
    %s40 = scalar_lea.vmem [#allocation0], 24
    %v41 = vld [vmem:[%s40] sm:%s24]
    %s42 = sshllo.u32 0, 1
    %s43 = smul.addr 1, 3
    %s44 = scalar_lea.vmem %s1, %s43
    %45 = vst [vmem:[%s44] sm:%s42] %v41

// kernel: positional_encoding_forward.1
$region0: #{positional_encoding_forward.1}
  #allocation0 [shape = 'u32[]', space=smem, size = 0x4, offset = 0x4, fixed_abs, tag = 'smem constant byte address 0x4 - core index']
  #allocation1 [shape = 'u32[144,128]{1,0:T(1,128)}', space=vmem, size = 0x12000, scoped, tag = 'internal scratch']
  %s0 = inlined_call_operand.vmem [shape: f32[8,512], index: 0, kind: input, shape index: {}, may-alias: {0,2}]
  %s1 = inlined_call_operand.vmem [shape: f32[1,512], index: 1, kind: input, shape index: {}]
  %s2 = inlined_call_operand.vmem [shape: f32[8,512], index: 2, kind: output, shape index: {}, may-alias: {0,2}]
  %s3 = sld [smem:[#allocation0]]
  $region18: #{positional_encoding_forward.1} parent=0
    _
  %s5 = ssub.s32 1, %s3
  %s6 = scalar_select 0, %s5, %s3
  // Predicated region
  $region2: #{positional_encoding_forward.1} parent=0 // pred_check
    _
  $region3: #{positional_encoding_forward.1} parent=0 // pred_check_branch
    %8 = sbr.rel (0) target = $region5
  $region4: #{positional_encoding_forward.1} parent=0 // pred_region
    _
  $region5: #{positional_encoding_forward.1} parent=0 // pred_fallthru
    _
  // Predicated region
  $region6: #{positional_encoding_forward.1} parent=0 // pred_check
    _
  $region7: #{positional_encoding_forward.1} parent=0 // pred_check_branch
    %10 = sbr.rel (0) target = $region9
  $region8: #{positional_encoding_forward.1} parent=0 // pred_region
    _
  $region9: #{positional_encoding_forward.1} parent=0 // pred_fallthru
    _
  %v11 = vld [vmem:[%s0] sm:$0xff]
  %v12 = vld [vmem:[%s0 + $0x8] sm:$0xff]
  %v13 = vld [vmem:[%s0 + $0x10] sm:$0xff]
  %v14 = vld [vmem:[%s0 + $0x18] sm:$0xff]
  %v15 = vld [vmem:[%s1] sm:$0xf]
  %v17 = vlaneseq
  %v18 = vshrl.u32 %v17, 7
  %v19 = vsub.s32 0, %v18
  %v20 = vrot.slane %v15, %v19
  %v21 = vlaneseq
  %v22 = vshrl.u32 %v21, 7
  %v23 = vsub.s32 1, %v22
  %v24 = vrot.slane %v15, %v23
  %v25 = vlaneseq
  %v26 = vshrl.u32 %v25, 7
  %v27 = vsub.s32 2, %v26
  %v28 = vrot.slane %v15, %v27
  %v29 = vlaneseq
  %v30 = vshrl.u32 %v29, 7
  %v31 = vsub.s32 3, %v30
  %v32 = vrot.slane %v15, %v31
  %v37 = vadd.f32 %v11, %v20
  %v38 = vadd.f32 %v12, %v24
  %v39 = vadd.f32 %v13, %v28
  %v40 = vadd.f32 %v14, %v32
  %41 = vst [vmem:[%s2] sm:$0xff] %v37
  %42 = vst [vmem:[%s2 + $0x8] sm:$0xff] %v38
  %43 = vst [vmem:[%s2 + $0x10] sm:$0xff] %v39
  %44 = vst [vmem:[%s2 + $0x18] sm:$0xff] %v40
  // Predicated region
  $region10: #{positional_encoding_forward.1} parent=0 // pred_check
    _
  $region11: #{positional_encoding_forward.1} parent=0 // pred_check_branch
    %46 = sbr.rel (0) target = $region13
  $region12: #{positional_encoding_forward.1} parent=0 // pred_region
    _
  $region13: #{positional_encoding_forward.1} parent=0 // pred_fallthru
    _
  // Predicated region
  $region14: #{positional_encoding_forward.1} parent=0 // pred_check
    _
  $region15: #{positional_encoding_forward.1} parent=0 // pred_check_branch
    %48 = sbr.rel (0) target = $region17
  $region16: #{positional_encoding_forward.1} parent=0 // pred_region
    _
  $region17: #{positional_encoding_forward.1} parent=0 // pred_fallthru
    _

</llo_original>
